<compile_context>
chip_gen: v5e
topology: v5e:2x2
jax: 0.10.0
libtpu: 0.0.40
codegen_flags: <defaults>
</compile_context>

<pallas_src>
import functools

import jax
import jax.numpy as jnp
from jax.experimental import pallas as pl
from jax.experimental.pallas import tpu as pltpu

# Fixed Gaussian window from the module's __init__ (deterministic constants).
W_CORNER = 0.0947   # window[0,0] == [0,2] == [2,0] == [2,2]
W_EDGE   = 0.1183   # window[0,1] == [1,0] == [1,2] == [2,1]
W_CENTER = 0.1478   # window[1,1]

GAUSS_WINDOW = [
    [W_CORNER, W_EDGE, W_CORNER],
    [W_EDGE, W_CENTER, W_EDGE],
    [W_CORNER, W_EDGE, W_CORNER],
]


def _cdiv(a, b):
    return -(-a // b)


def _round_up(a, m):
    return _cdiv(a, m) * m


def _num_tensorcores():
    # v7x has 2 TensorCores per chip (a 'parallel' grid axis is sharded across
    # them); v5e / v6e have 1, where extra grid steps only shrink DMAs.
    try:
        kind = jax.devices()[0].device_kind.lower()
    except Exception:
        return 1
    return 2 if "7" in kind else 1


def _vmem_limit_bytes(num_tc):
    # Physical VMEM: 128 MiB on v5e/v6e, 64 MiB per TensorCore on v7x.  Leave
    # headroom for double buffering + compiler-materialized stencil temps.
    cap = 64 * 1024 * 1024            # conservative default (v7x-sized)
    try:
        cap = int(pltpu.get_tpu_info().vmem_capacity_bytes)
    except Exception:
        pass
    if num_tc == 2:
        cap = min(cap, 64 * 1024 * 1024)
    return min((cap * 3) // 4, 96 * 1024 * 1024)


def _gaussian_avg_kernel(x_ref, o_ref, *, row):
    """3x3 Gaussian stencil on row-flattened planes.

    x_ref: (Nb, Hb*row)          flattened input planes (lane-dense minor dim)
    o_ref: (Nb, (Hb-2)*row - 2)  flattened output; positions k = i*row + j with
                                 j >= row-2 are wrap-around garbage and get
                                 discarded by the wrapper slice.
    out[k] = sum_{di,dj} w[di,dj] * x[k + di*row + dj]  (k = i*row + j).
    """
    n_out = o_ref.shape[-1]
    n_sum = n_out + 2 * row          # horizontal-sum length covering all 3 row taps

    def tap(off, n):
        # Direct lane-offset read from the ref; single upcast so the 9-tap sum
        # accumulates in f32 (v5e VPU has no bf16; matches f32 conv accumulation).
        return x_ref[:, pl.ds(off, n)].astype(jnp.float32)

    # Symmetric horizontal pass: s[k] = x[k] + x[k+2]  (the only materialized temp).
    s = tap(0, n_sum) + tap(2, n_sum)

    # Symmetric vertical combine with the exact spec weights:
    #   Wc*(s[k] + s[k+2W]) + We*(s[k+W] + x[k+1] + x[k+2W+1]) + Wm*x[k+W+1]
    out = (W_CORNER * (s[:, 0:n_out] + s[:, 2 * row:2 * row + n_out])
           + W_EDGE * (s[:, row:row + n_out]
                       + tap(1, n_out) + tap(2 * row + 1, n_out))
           + W_CENTER * tap(row + 1, n_out))

    o_ref[...] = out.astype(o_ref.dtype)


def _run_planes(xp, target_tile_bytes, vmem_limit_bytes, num_tc):
    """xp: (N, Hb, W) -> (N, Hb-2, W-2); depthwise 3x3 Gaussian, padding=0."""
    N, Hb, W = xp.shape
    Hob, Wo = Hb - 2, W - 2
    L_in = Hb * W
    L_out = Hob * W - 2              # last 2 (garbage) positions skipped: taps stay in-bounds
    item = jnp.dtype(xp.dtype).itemsize
    plane_bytes = L_in * item

    # --- block size along the fused (B*C) plane axis -------------------------
    nb = max(1, target_tile_bytes // plane_bytes)
    if nb >= N:
        nb = N                                     # full axis: any N is legal
    else:
        nb = max(8, (nb // 8) * 8)                 # tiled: sublane-aligned
    if num_tc == 2 and N >= 16:
        # v7x only: keep >= 2 grid steps so both TensorCores get work.
        nb = min(nb, _round_up(_cdiv(N, 2), 8))
    n_pad = _round_up(N, nb)
    steps = n_pad // nb
    if num_tc == 2 and steps > 1 and steps % 2 == 1:
        # Best-effort: shrink the block a notch to make the step count even.
        nb_try = max(8, (_cdiv(N, steps + 1) // 8) * 8)
        if _cdiv(N, nb_try) % 2 == 0:
            nb = nb_try
            n_pad = _round_up(N, nb)
            steps = n_pad // nb

    x_flat = xp.reshape(N, L_in)                   # free reshape (contiguous)
    if n_pad != N:
        x_flat = jnp.pad(x_flat, ((0, n_pad - N), (0, 0)))

    out_flat = pl.pallas_call(
        functools.partial(_gaussian_avg_kernel, row=W),
        out_shape=jax.ShapeDtypeStruct((n_pad, L_out), xp.dtype),
        grid_spec=pltpu.PrefetchScalarGridSpec(
            num_scalar_prefetch=0,
            grid=(steps,),
            in_specs=[pl.BlockSpec((nb, L_in), lambda i: (i, 0))],
            out_specs=pl.BlockSpec((nb, L_out), lambda i: (i, 0)),
        ),
        compiler_params=pltpu.CompilerParams(
            dimension_semantics=("parallel",),
            vmem_limit_bytes=vmem_limit_bytes,
        ),
    )(x_flat)

    # Layout plumbing outside the kernel (pure XLA): restore the 2 uncomputed
    # tail positions, fold lanes back into rows, drop the 2 wrap-around columns.
    out_flat = jnp.pad(out_flat[:N], ((0, 0), (0, 2)))
    return out_flat.reshape(N, Hob, W)[:, :, :Wo]


def gaussian_average(x):
    """Depthwise 3x3 Gaussian average with padding=0.  x: (B, C, H, W)."""
    B, C, H, W = x.shape
    if H < 3 or W < 3:
        raise ValueError("GaussianAverage needs H >= 3 and W >= 3")
    Ho, Wo = H - 2, W - 2
    N = B * C
    item = jnp.dtype(x.dtype).itemsize

    num_tc = _num_tensorcores()
    vmem_limit = _vmem_limit_bytes(num_tc)
    target_tile = max(1 << 20, vmem_limit // 24)   # ~2 MiB (v7x) / ~4 MiB (v5e/v6e)

    xp = x.reshape(N, H, W)                        # fuse batch & channel (free)

    if min(8, N) * H * W * item <= target_tile:
        out = _run_planes(xp, target_tile, vmem_limit, num_tc)
    else:
        # Huge planes: wrapper-level row bands with a 2-row halo keep every
        # block inside the per-generation VMEM budget.
        hc = max(1, target_tile // (min(8, N) * W * item) - 2)
        parts = [
            _run_planes(xp[:, r0:min(r0 + hc, Ho) + 2, :],
                        target_tile, vmem_limit, num_tc)
            for r0 in range(0, Ho, hc)
        ]
        out = jnp.concatenate(parts, axis=1)

    return out.reshape(B, C, Ho, Wo)


def _reference(x):
    # Pure-JAX reference of the same depthwise conv (sanity check).
    w = jnp.asarray(GAUSS_WINDOW, dtype=jnp.float32)
    B, C, H, W = x.shape
    Ho, Wo = H - 2, W - 2
    out = jnp.zeros((B, C, Ho, Wo), jnp.float32)
    xf = x.astype(jnp.float32)
    for di in range(3):
        for dj in range(3):
            out = out + w[di, dj] * xf[:, :, di:di + Ho, dj:dj + Wo]
    return out.astype(x.dtype)


if __name__ == "__main__":
    key = jax.random.PRNGKey(0)
    x = jax.random.normal(key, (2, 4, 16, 16), dtype=jnp.float32)

    out = gaussian_average(x)
    out = jax.block_until_ready(out)

    ref = _reference(x)
    assert out.shape == (2, 4, 14, 14), out.shape
    assert jnp.allclose(out, ref, atol=1e-5, rtol=1e-5), \
        float(jnp.max(jnp.abs(out - ref)))
    print("KERNEL_OK")
</pallas_src>

<mosaic_0001>
module attributes {stable_mosaic.version = 11 : i64} {
  func.func @_gaussian_avg_kernel(%arg0: i32, %arg1: memref<8x256xf32, #tpu.memory_space<vmem>>, %arg2: memref<8x222xf32, #tpu.memory_space<vmem>>) attributes {dimension_semantics = [#tpu.dimension_semantics<parallel>], iteration_bounds = array<i64: 1>, scalar_prefetch = 0 : i64, scratch_operands = 0 : i64, tpu.core_type = #tpu.core_type<tc>, window_params = [{transform_indices = @transform_0, window_bounds = array<i64: 8, 256>}, {transform_indices = @transform_1, window_bounds = array<i64: 8, 222>}]} {
    %c0 = arith.constant 0 : index
    %c0_0 = arith.constant 0 : index
    %0 = vector.load %arg1[%c0, %c0_0] : memref<8x256xf32, #tpu.memory_space<vmem>>, vector<8x254xf32>
    %c0_1 = arith.constant 0 : index
    %c2 = arith.constant 2 : index
    %1 = vector.load %arg1[%c0_1, %c2] : memref<8x256xf32, #tpu.memory_space<vmem>>, vector<8x254xf32>
    %2 = arith.addf %0, %1 : vector<8x254xf32>
    %3 = vector.extract_strided_slice %2 {offsets = [0, 0], sizes = [8, 222], strides = [1, 1]} : vector<8x254xf32> to vector<8x222xf32>
    %4 = vector.extract_strided_slice %2 {offsets = [0, 32], sizes = [8, 222], strides = [1, 1]} : vector<8x254xf32> to vector<8x222xf32>
    %5 = arith.addf %3, %4 : vector<8x222xf32>
    %cst = arith.constant 9.470000e-02 : f32
    %6 = vector.broadcast %cst : f32 to vector<8x222xf32>
    %7 = arith.mulf %6, %5 : vector<8x222xf32>
    %8 = vector.extract_strided_slice %2 {offsets = [0, 16], sizes = [8, 222], strides = [1, 1]} : vector<8x254xf32> to vector<8x222xf32>
    %c0_2 = arith.constant 0 : index
    %c1 = arith.constant 1 : index
    %9 = vector.load %arg1[%c0_2, %c1] : memref<8x256xf32, #tpu.memory_space<vmem>>, vector<8x222xf32>
    %10 = arith.addf %8, %9 : vector<8x222xf32>
    %c0_3 = arith.constant 0 : index
    %c33 = arith.constant 33 : index
    %11 = vector.load %arg1[%c0_3, %c33] : memref<8x256xf32, #tpu.memory_space<vmem>>, vector<8x222xf32>
    %12 = arith.addf %10, %11 : vector<8x222xf32>
    %cst_4 = arith.constant 1.183000e-01 : f32
    %13 = vector.broadcast %cst_4 : f32 to vector<8x222xf32>
    %14 = arith.mulf %13, %12 : vector<8x222xf32>
    %15 = arith.addf %7, %14 : vector<8x222xf32>
    %c0_5 = arith.constant 0 : index
    %c17 = arith.constant 17 : index
    %16 = vector.load %arg1[%c0_5, %c17] : memref<8x256xf32, #tpu.memory_space<vmem>>, vector<8x222xf32>
    %cst_6 = arith.constant 1.478000e-01 : f32
    %17 = vector.broadcast %cst_6 : f32 to vector<8x222xf32>
    %18 = arith.mulf %17, %16 : vector<8x222xf32>
    %19 = arith.addf %15, %18 : vector<8x222xf32>
    %c0_7 = arith.constant 0 : index
    %c0_8 = arith.constant 0 : index
    %20 = vector.load %arg2[%c0_7, %c0_8] : memref<8x222xf32, #tpu.memory_space<vmem>>, vector<8x222xf32>
    tpu.vector_store %arg2[%c0_7, %c0_8], %19 {strides = array<i32>} : memref<8x222xf32, #tpu.memory_space<vmem>>, vector<8x222xf32>,
    return
  }
  func.func @transform_0(%arg0: i32) -> (i32, i32) {
    %c0_i32 = arith.constant 0 : i32
    %c0_i32_0 = arith.constant 0 : i32
    return %arg0, %c0_i32 : i32, i32
  }
  func.func @transform_1(%arg0: i32) -> (i32, i32) {
    %c0_i32 = arith.constant 0 : i32
    %c0_i32_0 = arith.constant 0 : i32
    return %arg0, %c0_i32 : i32, i32
  }
}

</mosaic_0001>

<llo_original>
// kernel: tpu_custom_call.1
$region0: #{tpu_custom_call.1}
  #allocation0 [shape = 'u32[]', space=smem, size = 0x4, offset = 0x4, fixed_abs, tag = 'smem constant byte address 0x4 - core index']
  #allocation1 [shape = 'u32[72,128]{1,0:T(1,128)}', space=vmem, size = 0x9000, scoped, tag = 'internal scratch']
  %s0 = inlined_call_operand.hbm [shape: f32[8,256], index: 0, kind: input, shape index: {}]
  %s1 = inlined_call_operand.hbm [shape: f32[8,222], index: 1, kind: output, shape index: {}]
  %s2 = sld [smem:[#allocation0]]
  $region18: #{tpu_custom_call.1} parent=0
    _
  %s4 = ssub.s32 1, %s2
  %s5 = scalar_select 0, %s4, %s2
  $region1: #{tpu_custom_call.1} parent=0
    #allocation2 [shape = 'u8[8192]{0}', space=vmem, size = 0x2000, scoped, tag = 'input window, operand 0, single buffered']
    #allocation3 [shape = 's32[1]{0}', space=sflag, size = 0x4, scoped, tag = 'scoped memory for tpu_custom_call.1']
    #allocation4 [shape = 's32[1]{0}', space=sflag, size = 0x4, scoped, tag = 'scoped memory for tpu_custom_call.1']
    #allocation5 [shape = 'u8[8192]{0}', space=vmem, size = 0x2000, scoped, tag = 'output window, operand 0, single buffered']
    %6 = vsyncpa [#allocation3], 0
    %7 = vsyncpa [#allocation4], 0
    // Predicated region
    $region2: #{tpu_custom_call.1} parent=1 // pred_check
      _
    $region3: #{tpu_custom_call.1} parent=1 // pred_check_branch
      %9 = sbr.rel (0) target = $region5
    $region4: #{tpu_custom_call.1} parent=1 // pred_region
      %11 = vsyncadd [#allocation3], 0
      %s13 = sshll.u32 %s0, 4
      %s14 = int_to_ptr.hbm [resolvable:$true] %s13
      %s15 = sshll.u32 [#allocation2], 4
      %s16 = int_to_ptr.vmem [resolvable:$true] %s15
      %18 = dma.hbm_to_vmem [thread:$0]  %s14, 256, %s16, [#allocation3]
    $region5: #{tpu_custom_call.1} parent=1 // pred_fallthru
      _
    // Predicated region
    $region6: #{tpu_custom_call.1} parent=1 // pred_check
      _
    $region7: #{tpu_custom_call.1} parent=1 // pred_check_branch
      %20 = sbr.rel (0) target = $region9
    $region8: #{tpu_custom_call.1} parent=1 // pred_region
      %22 = dma.done [#allocation3], 256
    $region9: #{tpu_custom_call.1} parent=1 // pred_fallthru
      _
    %v23 = vld [vmem:[#allocation2] sm:$0xff]
    %v24 = vld [vmem:[#allocation2 + $0x8] sm:$0xff]
    %27 = vrot.lane.b32.xlu0 %v23, 126
    %v28 = vpop.permute.xlu0 %27
    %29 = vrot.lane.b32.xlu0 %v24, 126
    %v30 = vpop.permute.xlu0 %29
    %vm31 = vcmask 1031168
    %v32 = vsel %vm31, %v28, %v30
    %v35 = vadd.f32 %v23, %v32
    %v36 = vadd.f32 %v24, %v30
    %39 = vrot.lane.b32.xlu0 %v35, 96
    %v40 = vpop.permute.xlu0 %39
    %41 = vrot.lane.b32.xlu0 %v36, 96
    %v42 = vpop.permute.xlu0 %41
    %vm43 = vcmask 785408
    %v44 = vsel %vm43, %v40, %v42
    %v47 = vadd.f32 %v35, %v44
    %v48 = vadd.f32 %v36, %v42
    %v49 = vmul.f32 %v47, 0.0947
    %v50 = vmul.f32 %v48, 0.0947
    %51 = vrot.lane.b32.xlu0 %v23, 15
    %v52 = vpop.permute.xlu0 %51
    %53 = vrot.lane.b32.xlu0 %v24, 15
    %v54 = vpop.permute.xlu0 %53
    %vm55 = vcmask 121856
    %v56 = vsel %vm55, %v52, %v54
    %v59 = vadd.f32 %v35, %v52
    %v60 = vadd.f32 %v36, %v56
    %61 = vrot.lane.b32.xlu0 %v23, 111
    %v62 = vpop.permute.xlu0 %61
    %63 = vrot.lane.b32.xlu0 %v24, 111
    %v64 = vpop.permute.xlu0 %63
    %vm65 = vcmask 908288
    %v66 = vsel %vm65, %v62, %v64
    %v69 = vadd.f32 %v59, %v66
    %v70 = vadd.f32 %v60, %v64
    %v71 = vmul.f32 %v69, 0.1183
    %v72 = vmul.f32 %v70, 0.1183
    %75 = vrot.lane.b32.xlu0 %v71, 112
    %v76 = vpop.permute.xlu0 %75
    %77 = vrot.lane.b32.xlu0 %v72, 112
    %v78 = vpop.permute.xlu0 %77
    %vm79 = vcmask 916480
    %v80 = vsel %vm79, %v76, %v78
    %v83 = vadd.f32 %v49, %v80
    %v84 = vadd.f32 %v50, %v78
    %v85 = vmul.f32 %v23, 0.1478
    %v86 = vmul.f32 %v24, 0.1478
    %89 = vrot.lane.b32.xlu0 %v85, 111
    %v90 = vpop.permute.xlu0 %89
    %91 = vrot.lane.b32.xlu0 %v86, 111
    %v92 = vpop.permute.xlu0 %91
    %v93 = vsel %vm65, %v90, %v92
    %v96 = vadd.f32 %v83, %v93
    %v97 = vadd.f32 %v84, %v92
    %98 = vst [vmem:[#allocation5] sm:$0xff] %v96
    %vm99 = vcmask 769024
    %100 = vst.msk [vmem:[#allocation5 + $0x8] sm:$0xff] %vm99, %v97
    // Predicated region
    $region10: #{tpu_custom_call.1} parent=1 // pred_check
      _
    $region11: #{tpu_custom_call.1} parent=1 // pred_check_branch
      %102 = sbr.rel (0) target = $region13
    $region12: #{tpu_custom_call.1} parent=1 // pred_region
      %104 = vsyncadd [#allocation4], 0
      %s106 = sshll.u32 [#allocation5], 4
      %s107 = int_to_ptr.vmem [resolvable:$true] %s106
      %s108 = sshll.u32 %s1, 4
      %s109 = int_to_ptr.hbm [resolvable:$true] %s108
      %111 = dma.vmem_to_hbm [thread:$0]  %s107, 256, %s109, [#allocation4]
    $region13: #{tpu_custom_call.1} parent=1 // pred_fallthru
      _
    // Predicated region
    $region14: #{tpu_custom_call.1} parent=1 // pred_check
      _
    $region15: #{tpu_custom_call.1} parent=1 // pred_check_branch
      %113 = sbr.rel (0) target = $region17
    $region16: #{tpu_custom_call.1} parent=1 // pred_region
      %115 = dma.done [#allocation4], 256
    $region17: #{tpu_custom_call.1} parent=1 // pred_fallthru
      _
    %116 = vsyncpa [#allocation3], 1
    %117 = vsyncpa [#allocation4], 1

</llo_original>
